<compile_context>
chip_gen: v7x
topology: tpu7x:2x2x1
jax: 0.10.0
libtpu: 0.0.40
codegen_flags: <defaults>
</compile_context>

<pallas_src>
import functools

import jax
import jax.numpy as jnp
from jax.experimental import pallas as pl
from jax.experimental.pallas import tpu as pltpu


def _round_up(x, m):
    return (x + m - 1) // m * m


# --------------------------------------------------------------------------
# Pass 1: conv tile matmul + per-channel sum / sum-of-squares accumulation.
# Output block (8, Cp) stays resident across the "arbitrary" M axis; each
# core-split c owns a disjoint (8, Cp) slab of the stats output.
# --------------------------------------------------------------------------
def _conv_stats_kernel(p_ref, w_ref, stats_ref):
    # p: (TM, K) bf16   w: (K, Cp) bf16   stats: (8, Cp) f32 (rows 0/1 used)
    conv = jnp.dot(p_ref[...], w_ref[...], preferred_element_type=jnp.float32)

    @pl.when(pl.program_id(1) == 0)
    def _():
        stats_ref[...] = jnp.zeros_like(stats_ref)

    s = jnp.sum(conv, axis=0, keepdims=True)            # (1, Cp)
    ss = jnp.sum(conv * conv, axis=0, keepdims=True)    # (1, Cp)
    rid = jax.lax.broadcasted_iota(jnp.int32, (8, 1), 0)
    # Full-tile update: row 0 <- sum, row 1 <- sum of squares, rows 2..7 <- 0.
    upd = jnp.where(rid == 0, s, 0.0) + jnp.where(rid == 1, ss, 0.0)
    stats_ref[...] += upd


# --------------------------------------------------------------------------
# Pass 2: recompute conv tile, apply BN (batch stats) + LeakyReLU, store the
# true (unpadded) channel dim.
# --------------------------------------------------------------------------
def _conv_bn_act_kernel(p_ref, w_ref, stats_ref, gamma_ref, beta_ref, o_ref, *,
                        inv_m, eps, negative_slope, num_splits, cout):
    # Identical dot as pass 1 -> BN statistics are self-consistent with it.
    conv = jnp.dot(p_ref[...], w_ref[...], preferred_element_type=jnp.float32)

    tot = stats_ref[0:8, :]
    for si in range(1, num_splits):                      # sum per-core partials
        tot = tot + stats_ref[8 * si:8 * (si + 1), :]
    mean = tot[0:1, :] * inv_m
    var = jnp.maximum(tot[1:2, :] * inv_m - mean * mean, 0.0)   # biased variance
    scale = gamma_ref[...] * jax.lax.rsqrt(var + eps)           # (1, Cp)
    shift = beta_ref[...] - mean * scale                        # (1, Cp)

    y = conv * scale + shift
    y = jnp.where(y >= 0, y, negative_slope * y)
    # Store only the real channels (16x fewer writeback bytes than Cp=128).
    o_ref[...] = y[:, :cout].astype(o_ref.dtype)


# --------------------------------------------------------------------------
# Wrapper-side patch extraction (bf16, K left unpadded).
# --------------------------------------------------------------------------
def _im2col_nhwc(x_nhwc, kh, kw, stride, padding):
    """Extract conv patches. Returns (N*Ho*Wo, kh*kw*Cin), Ho, Wo."""
    n, h, w, c = x_nhwc.shape
    xp = jnp.pad(x_nhwc, ((0, 0), (padding, padding), (padding, padding), (0, 0)))
    ho = (h + 2 * padding - kh) // stride + 1
    wo = (w + 2 * padding - kw) // stride + 1
    tiles = []
    for i in range(kh):
        for j in range(kw):
            tiles.append(xp[:, i:i + stride * ho:stride, j:j + stride * wo:stride, :])
    # (N, Ho, Wo, kh*kw, Cin) -> rows flattened as (i*kw + j)*Cin + cin
    p = jnp.stack(tiles, axis=3)
    return p.reshape(n * ho * wo, kh * kw * c), ho, wo


def conv2d_stack_forward(x_nchw, weight_oihw, bias, gamma, beta,
                         *, stride=1, padding=1, eps=1e-5, negative_slope=0.1,
                         block_m=1024, num_core_splits=2):
    """Forward pass equivalent to PyTorch Conv2dStack.forward (training-mode BN)."""
    n, cin, h, w = x_nchw.shape
    cout, cin_w, kh, kw = weight_oihw.shape
    assert cin == cin_w
    del bias  # Per-channel conv bias cancels exactly under training-mode BatchNorm.

    x_nhwc = jnp.transpose(x_nchw, (0, 2, 3, 1))
    patches, ho, wo = _im2col_nhwc(x_nhwc, kh, kw, stride, padding)
    m, k = patches.shape

    cp = _round_up(cout, 128)                         # lane-dense matmul width
    block_m = max(8, min(block_m, _round_up(m, 256))) # don't exceed problem size
    n_tiles = pl.cdiv(m, block_m)
    num_core_splits = max(1, min(num_core_splits, n_tiles))
    mp = _round_up(m, block_m * num_core_splits)      # padded rows are exact zeros
    grid_m_per = mp // (block_m * num_core_splits)

    patches_p = jnp.zeros((mp, k), jnp.bfloat16).at[:m, :].set(
        patches.astype(jnp.bfloat16))
    # (Cout, Cin, kh, kw) -> (kh, kw, Cin, Cout) -> (K, Cout); matches im2col rows.
    w2d = jnp.transpose(weight_oihw, (2, 3, 1, 0)).reshape(k, cout)
    w_p = jnp.zeros((k, cp), jnp.bfloat16).at[:, :cout].set(w2d.astype(jnp.bfloat16))
    gamma_p = jnp.ones((1, cp), jnp.float32).at[:, :cout].set(
        gamma.reshape(1, cout).astype(jnp.float32))
    beta_p = jnp.zeros((1, cp), jnp.float32).at[:, :cout].set(
        beta.reshape(1, cout).astype(jnp.float32))

    # v7x-safe scoped budget; tiles here are tiny.  Raise to 64-96 MiB on
    # v5e/v6e (128 MiB physical) when using production block_m / K / Cout.
    vmem_limit = 32 * 1024 * 1024

    # ---------------- pass 1: conv + per-core partial batch statistics ----------------
    stats = pl.pallas_call(
        _conv_stats_kernel,
        out_shape=jax.ShapeDtypeStruct((8 * num_core_splits, cp), jnp.float32),
        grid=(num_core_splits, grid_m_per),
        in_specs=[pl.BlockSpec((block_m, k), lambda c, i: (c * grid_m_per + i, 0)),
                  pl.BlockSpec((k, cp), lambda c, i: (0, 0))],
        out_specs=pl.BlockSpec((8, cp), lambda c, i: (c, 0)),
        compiler_params=pltpu.CompilerParams(
            dimension_semantics=("parallel", "arbitrary"),
            vmem_limit_bytes=vmem_limit),
        cost_estimate=pl.CostEstimate(
            flops=2 * mp * k * cp + 3 * mp * cp,
            transcendentals=0,
            bytes_accessed=mp * k * 2 + k * cp * 2 + 8 * num_core_splits * cp * 4),
    )(patches_p, w_p)

    # ---------------- pass 2: recompute conv, BN + LeakyReLU, unpadded store ----------------
    kern2 = functools.partial(
        _conv_bn_act_kernel, inv_m=1.0 / m, eps=eps,
        negative_slope=negative_slope, num_splits=num_core_splits, cout=cout)
    out_flat = pl.pallas_call(
        kern2,
        out_shape=jax.ShapeDtypeStruct((mp, cout), jnp.float32),
        grid=(num_core_splits * grid_m_per,),
        in_specs=[pl.BlockSpec((block_m, k), lambda i: (i, 0)),
                  pl.BlockSpec((k, cp), lambda i: (0, 0)),
                  pl.BlockSpec((8 * num_core_splits, cp), lambda i: (0, 0)),
                  pl.BlockSpec((1, cp), lambda i: (0, 0)),
                  pl.BlockSpec((1, cp), lambda i: (0, 0))],
        out_specs=pl.BlockSpec((block_m, cout), lambda i: (i, 0)),
        compiler_params=pltpu.CompilerParams(
            dimension_semantics=("parallel",),
            vmem_limit_bytes=vmem_limit),
        cost_estimate=pl.CostEstimate(
            flops=2 * mp * k * cp + 6 * mp * cp,
            transcendentals=cp,
            bytes_accessed=mp * k * 2 + k * cp * 2 + mp * cout * 4
                           + (8 * num_core_splits + 2) * cp * 4),
    )(patches_p, w_p, stats, gamma_p, beta_p)

    # (Mp, Cout) -> unpad -> (N, Ho, Wo, Cout) -> NCHW (PyTorch layout).
    out = out_flat[:m, :].reshape(n, ho, wo, cout)
    return jnp.transpose(out, (0, 3, 1, 2)).astype(x_nchw.dtype)


# --------------------------------------------------------------------------
# Pure-JAX reference (includes the conv bias; it must cancel under BN).
# --------------------------------------------------------------------------
def _reference_forward(x, weight, bias, gamma, beta, *, stride, padding, eps,
                       negative_slope):
    conv = jax.lax.conv_general_dilated(
        x, weight, window_strides=(stride, stride),
        padding=[(padding, padding), (padding, padding)],
        dimension_numbers=("NCHW", "OIHW", "NCHW"))
    conv = conv + bias.reshape(1, -1, 1, 1)
    mean = jnp.mean(conv, axis=(0, 2, 3), keepdims=True)
    var = jnp.mean((conv - mean) ** 2, axis=(0, 2, 3), keepdims=True)  # biased
    y = (conv - mean) * jax.lax.rsqrt(var + eps)
    y = y * gamma.reshape(1, -1, 1, 1) + beta.reshape(1, -1, 1, 1)
    return jnp.where(y >= 0, y, negative_slope * y)


if __name__ == "__main__":
    # Small shapes consistent with the module: in_channels=4, out_channels=8,
    # kernel_size=3, padding=1, stride=1, input (2, 4, 16, 16).
    key = jax.random.PRNGKey(0)
    k_x, k_w, k_b = jax.random.split(key, 3)

    N, CIN, H, W = 2, 4, 16, 16
    COUT, KH, KW = 8, 3, 3

    x = jax.random.normal(k_x, (N, CIN, H, W), dtype=jnp.float32)
    fan_in = CIN * KH * KW
    weight = jax.random.normal(k_w, (COUT, CIN, KH, KW), dtype=jnp.float32) / jnp.sqrt(fan_in)
    bias = jax.random.normal(k_b, (COUT,), dtype=jnp.float32) * 0.01
    gamma = jnp.ones((COUT,), dtype=jnp.float32)   # BatchNorm2d.weight init
    beta = jnp.zeros((COUT,), dtype=jnp.float32)   # BatchNorm2d.bias init

    # block_m=128 here so the tiny test shape still exercises multi-tile stats
    # accumulation and the 2-way core-split grid; the default is 1024 for
    # production shapes (per the perf review).
    out = conv2d_stack_forward(x, weight, bias, gamma, beta,
                               stride=1, padding=1, eps=1e-5, negative_slope=0.1,
                               block_m=128)
    jax.block_until_ready(out)

    assert out.shape == (N, COUT, H, W), out.shape
    assert bool(jnp.all(jnp.isfinite(out)))

    ref = _reference_forward(x, weight, bias, gamma, beta,
                             stride=1, padding=1, eps=1e-5, negative_slope=0.1)
    max_err = float(jnp.max(jnp.abs(out - ref)))
    assert max_err < 0.1, f"max abs error vs reference: {max_err}"

    print("KERNEL_OK")
</pallas_src>

<mosaic_0001>
module attributes {stable_mosaic.version = 11 : i64} {
  func.func @_conv_stats_kernel(%arg0: i32, %arg1: i32, %arg2: memref<128x36xbf16, #tpu.memory_space<vmem>>, %arg3: memref<36x128xbf16, #tpu.memory_space<vmem>>, %arg4: memref<8x128xf32, #tpu.memory_space<vmem>>) attributes {dimension_semantics = [#tpu.dimension_semantics<parallel>, #tpu.dimension_semantics<arbitrary>], iteration_bounds = array<i64: 2, 2>, scalar_prefetch = 0 : i64, scratch_operands = 0 : i64, tpu.core_type = #tpu.core_type<tc>, window_params = [{transform_indices = @transform_0, window_bounds = array<i64: 128, 36>}, {pipeline_mode = #tpu.pipeline_mode<synchronous>, transform_indices = @transform_1, window_bounds = array<i64: 36, 128>}, {transform_indices = @transform_2, window_bounds = array<i64: 8, 128>}]} {
    %c0 = arith.constant 0 : index
    %c0_0 = arith.constant 0 : index
    %0 = vector.load %arg2[%c0, %c0_0] : memref<128x36xbf16, #tpu.memory_space<vmem>>, vector<128x36xbf16>
    %c0_1 = arith.constant 0 : index
    %c0_2 = arith.constant 0 : index
    %1 = vector.load %arg3[%c0_1, %c0_2] : memref<36x128xbf16, #tpu.memory_space<vmem>>, vector<36x128xbf16>
    %cst = arith.constant dense<0.000000e+00> : vector<128x128xf32>
    %2 = tpu.matmul %0, %1, %cst {dimension_numbers = #tpu.dot_dimension_numbers<[1], [0], [0], [1], [0, 0, 1, 1], [], []>} : vector<128x36xbf16>, vector<36x128xbf16>, vector<128x128xf32> -> vector<128x128xf32>
    %c0_i32 = arith.constant 0 : i32
    %3 = arith.cmpi eq, %arg1, %c0_i32 : i32
    %4 = arith.extui %3 : i1 to i32
    %c0_i32_3 = arith.constant 0 : i32
    %5 = arith.cmpi ne, %4, %c0_i32_3 : i32
    scf.if %5 {
      %cst_13 = arith.constant 0.000000e+00 : f32
      %32 = vector.broadcast %cst_13 : f32 to vector<8x128xf32>
      %c0_14 = arith.constant 0 : index
      %c0_15 = arith.constant 0 : index
      %33 = vector.load %arg4[%c0_14, %c0_15] : memref<8x128xf32, #tpu.memory_space<vmem>>, vector<8x128xf32>
      tpu.vector_store %arg4[%c0_14, %c0_15], %32 {strides = array<i32>} : memref<8x128xf32, #tpu.memory_space<vmem>>, vector<8x128xf32>,
    } else {
    }
    %cst_4 = arith.constant dense<0.000000e+00> : vector<128xf32>
    %6 = vector.multi_reduction <add>, %2, %cst_4 [0] : vector<128x128xf32> to vector<128xf32>
    %7 = vector.shape_cast %6 : vector<128xf32> to vector<1x128xf32>
    %8 = arith.mulf %2, %2 : vector<128x128xf32>
    %cst_5 = arith.constant dense<0.000000e+00> : vector<128xf32>
    %9 = vector.multi_reduction <add>, %8, %cst_5 [0] : vector<128x128xf32> to vector<128xf32>
    %10 = vector.shape_cast %9 : vector<128xf32> to vector<1x128xf32>
    %11 = tpu.iota {dimensions = array<i32: 0>} : vector<8x1xi32>
    %c0_i32_6 = arith.constant 0 : i32
    %12 = vector.broadcast %c0_i32_6 : i32 to vector<8x1xi32>
    %13 = arith.cmpi eq, %11, %12 : vector<8x1xi32>
    %cst_7 = arith.constant 0.000000e+00 : f32
    %14 = vector.shape_cast %13 : vector<8x1xi1> to vector<8x1xi1>
    %15 = vector.broadcast %14 : vector<8x1xi1> to vector<8x128xi1>
    %16 = vector.shape_cast %7 : vector<1x128xf32> to vector<1x128xf32>
    %17 = vector.broadcast %16 : vector<1x128xf32> to vector<8x128xf32>
    %18 = vector.broadcast %cst_7 : f32 to vector<8x128xf32>
    %19 = arith.select %15, %17, %18 : vector<8x128xi1>, vector<8x128xf32>
    %c1_i32 = arith.constant 1 : i32
    %20 = vector.broadcast %c1_i32 : i32 to vector<8x1xi32>
    %21 = arith.cmpi eq, %11, %20 : vector<8x1xi32>
    %cst_8 = arith.constant 0.000000e+00 : f32
    %22 = vector.shape_cast %21 : vector<8x1xi1> to vector<8x1xi1>
    %23 = vector.broadcast %22 : vector<8x1xi1> to vector<8x128xi1>
    %24 = vector.shape_cast %10 : vector<1x128xf32> to vector<1x128xf32>
    %25 = vector.broadcast %24 : vector<1x128xf32> to vector<8x128xf32>
    %26 = vector.broadcast %cst_8 : f32 to vector<8x128xf32>
    %27 = arith.select %23, %25, %26 : vector<8x128xi1>, vector<8x128xf32>
    %28 = arith.addf %19, %27 : vector<8x128xf32>
    %c0_9 = arith.constant 0 : index
    %c0_10 = arith.constant 0 : index
    %29 = vector.load %arg4[%c0_9, %c0_10] : memref<8x128xf32, #tpu.memory_space<vmem>>, vector<8x128xf32>
    %30 = arith.addf %29, %28 : vector<8x128xf32>
    %c0_11 = arith.constant 0 : index
    %c0_12 = arith.constant 0 : index
    %31 = vector.load %arg4[%c0_11, %c0_12] : memref<8x128xf32, #tpu.memory_space<vmem>>, vector<8x128xf32>
    tpu.vector_store %arg4[%c0_11, %c0_12], %30 {strides = array<i32>} : memref<8x128xf32, #tpu.memory_space<vmem>>, vector<8x128xf32>,
    return
  }
  func.func @transform_0(%arg0: i32, %arg1: i32) -> (i32, i32) {
    %c2_i32 = arith.constant 2 : i32
    %0 = arith.muli %arg0, %c2_i32 : i32
    %1 = arith.addi %0, %arg1 : i32
    %c0_i32 = arith.constant 0 : i32
    %c0_i32_0 = arith.constant 0 : i32
    return %1, %c0_i32 : i32, i32
  }
  func.func @transform_1(%arg0: i32, %arg1: i32) -> (i32, i32) {
    %c0_i32 = arith.constant 0 : i32
    %c0_i32_0 = arith.constant 0 : i32
    %c0_i32_1 = arith.constant 0 : i32
    return %c0_i32, %c0_i32_0 : i32, i32
  }
  func.func @transform_2(%arg0: i32, %arg1: i32) -> (i32, i32) {
    %c0_i32 = arith.constant 0 : i32
    %c0_i32_0 = arith.constant 0 : i32
    return %arg0, %c0_i32 : i32, i32
  }
}

</mosaic_0001>

<llo_original>
// kernel: tpu_custom_call.1
$region0: #{tpu_custom_call.1}
  #allocation0 [shape = 'u32[]', space=smem, size = 0x4, offset = 0x4, fixed_abs, tag = 'smem constant byte address 0x4 - core index']
  #allocation1 [shape = 'u32[144,128]{1,0:T(1,128)}', space=vmem, size = 0x12000, scoped, tag = 'internal scratch']
  %s0 = inlined_call_operand.vmem [shape: bf16[512,36], index: 0, kind: input, shape index: {}]
  %s1 = inlined_call_operand.vmem [shape: bf16[36,128], index: 1, kind: input, shape index: {}]
  %s2 = inlined_call_operand.hbm [shape: f32[16,128], index: 2, kind: output, shape index: {}]
  %s3 = sld [smem:[#allocation0]]
  $region45: #{tpu_custom_call.1} parent=0
    _
  %s5 = ssub.s32 1, %s3
  %s6 = scalar_select 0, %s5, %s3
  $region1: #{tpu_custom_call.1} parent=0
    #allocation2 [shape = 'u8[8192]{0}', space=vmem, size = 0x2000, scoped, tag = 'output window, operand 0']
    #allocation3 [shape = 's32[2]{0}', space=sflag, size = 0x8, scoped, tag = 'scoped memory for tpu_custom_call.1']
    %7 = vsyncpa [#allocation3], 0
    %s8 = scalar_lea.sflag [#allocation3], 1
    %9 = vsyncpa %s8, 0
    loop: start=0, step=1, limit=6
    $region2: #{tpu_custom_call.1} parent=1 // loop_pre_header
      _
    $region3: #{tpu_custom_call.1} parent=1 // loop_header
      %s11 = sphi 0, %s15
      %p12 = scmp.ge.s32.totalorder %s11, 6
      %s18 = sphi 0, %s30
      %s19 = sphi 0, %s26
      %s20 = sphi 0, %s18
      %s21 = sphi 0, %s19
      %s22 = sphi 0, %s20
      %s23 = sphi 0, %s21
      %s37 = sphi 0, %s39
      %s40 = sphi 0, %s37
      %s41 = sphi 0, %s40
      %s57 = sphi 0, %s41
      %s61 = sphi 0, %s61
      %s63 = sphi 0, %s61
      %s64 = sphi 0, %s63
      %s78 = sphi 0, %s64
      %s84 = sphi 0, %s86
      %s87 = sphi 0, %s84
      %s88 = sphi 0, %s87
      %s104 = sphi 0, %s88
    $region4: #{tpu_custom_call.1} parent=1 // loop_header_branch
      %14 = sbr.rel (%p12) target = $region8
    $region5: #{tpu_custom_call.1} parent=1 // loop_body
      %s16 = ssub.s32 %s11, 1
      %s17 = ssub.s32 %s11, 2
      %s24 = sadd.s32 1, %s19
      %p25 = scmp.ge.s32.totalorder %s24, 2
      %s26 = scalar_select %p25, 0, %s24
      %s27 = sadd.s32 1, %s18
      %s28 = scalar_select %p25, %s27, %s18
      %p29 = scmp.ge.s32.totalorder %s28, 2
      %s30 = scalar_select %p29, 0, %s28
      %s31 = smul.u32 %s18, 2
      %s32 = sadd.s32 %s31, %s19
      %s33 = smul.u32 %s30, 2
      %s34 = sadd.s32 %s33, %s26
      %s35 = ssub.s32 %s32, %s34
      %p36 = scmp.eq.s32.totalorder %s35, 0
      %s38 = sadd.s32 %s37, 1
      %s39 = scalar_select %p36, %s37, %s38
      %p42 = pneg %p36
      %p43 = scmp.eq.s32.totalorder %s11, 3
      %p44 = por %p42, %p43
      %p45 = scmp.ne.s32.totalorder %s37, %s40
      %p46 = scmp.eq.s32.totalorder %s11, 0
      %p47 = por %p45, %p46
      %p48 = scmp.ne.s32.totalorder %s37, %s40
      %p49 = scmp.eq.s32.totalorder %s16, 3
      %p50 = por %p48, %p49
      %p51 = scmp.ne.s32.totalorder %s40, %s41
      %p52 = scmp.eq.s32.totalorder %s16, 0
      %p53 = por %p51, %p52
      %p54 = scmp.ne.s32.totalorder %s40, %s41
      %p55 = scmp.eq.s32.totalorder %s17, 3
      %p56 = por %p54, %p55
      %p58 = scmp.ne.s32.totalorder %s41, %s57
      %p59 = scmp.eq.s32.totalorder %s17, 0
      %p60 = por %p58, %p59
      %s62 = sadd.s32 %s61, 1
      %p65 = scmp.eq.s32.totalorder %s11, 3
      %p66 = scmp.ne.s32.totalorder %s61, %s63
      %p67 = scmp.eq.s32.totalorder %s11, 0
      %p68 = por %p66, %p67
      %p69 = scmp.ne.s32.totalorder %s61, %s63
      %p70 = scmp.eq.s32.totalorder %s16, 3
      %p71 = por %p69, %p70
      %p72 = scmp.ne.s32.totalorder %s63, %s64
      %p73 = scmp.eq.s32.totalorder %s16, 0
      %p74 = por %p72, %p73
      %p75 = scmp.ne.s32.totalorder %s63, %s64
      %p76 = scmp.eq.s32.totalorder %s17, 3
      %p77 = por %p75, %p76
      %p79 = scmp.ne.s32.totalorder %s64, %s78
      %p80 = scmp.eq.s32.totalorder %s17, 0
      %p81 = por %p79, %p80
      %s82 = ssub.s32 %s18, %s30
      %p83 = scmp.eq.s32.totalorder %s82, 0
      %s85 = sadd.s32 %s84, 1
      %s86 = scalar_select %p83, %s84, %s85
      %p89 = pneg %p83
      %p90 = scmp.eq.s32.totalorder %s11, 3
      %p91 = por %p89, %p90
      %p92 = scmp.ne.s32.totalorder %s84, %s87
      %p93 = scmp.eq.s32.totalorder %s11, 0
      %p94 = por %p92, %p93
      %p95 = scmp.ne.s32.totalorder %s84, %s87
      %p96 = scmp.eq.s32.totalorder %s16, 3
      %p97 = por %p95, %p96
      %p98 = scmp.ne.s32.totalorder %s87, %s88
      %p99 = scmp.eq.s32.totalorder %s16, 0
      %p100 = por %p98, %p99
      %p101 = scmp.ne.s32.totalorder %s87, %s88
      %p102 = scmp.eq.s32.totalorder %s17, 3
      %p103 = por %p101, %p102
      %p105 = scmp.ne.s32.totalorder %s88, %s104
      %p106 = scmp.eq.s32.totalorder %s17, 0
      %p107 = por %p105, %p106
      %p108 = scmp.le.s32.totalorder 1, %s11
      %p109 = scmp.lt.s32.totalorder %s11, 5
      %p110 = pnand %p108, %p109
      %p111 = pneg %p110
      // Predicated region
      $region9: #{tpu_custom_call.1} parent=5 // pred_check
        _
      $region10: #{tpu_custom_call.1} parent=5 // pred_check_branch
        %113 = sbr.rel (%p110) target = $region12
      $region11: #{tpu_custom_call.1} parent=5 // pred_region
        %s114 = ssub.s32 %s11, 1
        // Predicated region
        $region13: #{tpu_custom_call.1} parent=11 // pred_check
          %p115 = pneg %p74
        $region14: #{tpu_custom_call.1} parent=11 // pred_check_branch
          %117 = sbr.rel (%p115) target = $region16
        $region15: #{tpu_custom_call.1} parent=11 // pred_region
          _
        $region16: #{tpu_custom_call.1} parent=11 // pred_fallthru
          _
      $region12: #{tpu_custom_call.1} parent=5 // pred_fallthru
        _
      %p118 = scmp.lt.s32.totalorder %s11, 4
      // Predicated region
      $region17: #{tpu_custom_call.1} parent=5 // pred_check
        %p119 = pneg %p118
      $region18: #{tpu_custom_call.1} parent=5 // pred_check_branch
        %121 = sbr.rel (%p119) target = $region20
      $region19: #{tpu_custom_call.1} parent=5 // pred_region
        // Predicated region
        $region21: #{tpu_custom_call.1} parent=19 // pred_check
          %p122 = pneg %p47
        $region22: #{tpu_custom_call.1} parent=19 // pred_check_branch
          %124 = sbr.rel (%p122) target = $region24
        $region23: #{tpu_custom_call.1} parent=19 // pred_region
          %s125 = smul.u32 %s18, 2
          %s126 = sadd.s32 %s125, %s19
          %s127 = smul.u32 16, %s126
          %p128 = scmp.lt.s32.totalorder %s127, 63
          %s129 = scalar_select %p128, %s127, 63
          %s130 = smul.addr %s129, 4
          %s131 = scalar_lea.vmem %s0, %s130
          %s132 = smul.u32 %s18, 2
          %s133 = sadd.s32 %s132, %s19
          %s134 = smul.u32 16, %s133
        $region24: #{tpu_custom_call.1} parent=19 // pred_fallthru
          _
      $region20: #{tpu_custom_call.1} parent=5 // pred_fallthru
        _
      %p135 = scmp.le.s32.totalorder 1, %s11
      %p136 = scmp.lt.s32.totalorder %s11, 5
      %p137 = pnand %p135, %p136
      %p138 = pneg %p137
      // Predicated region
      $region25: #{tpu_custom_call.1} parent=5 // pred_check
        _
      $region26: #{tpu_custom_call.1} parent=5 // pred_check_branch
        %140 = sbr.rel (%p137) target = $region28
      $region27: #{tpu_custom_call.1} parent=5 // pred_region
        %s141 = ssub.s32 %s11, 1
        %s142 = smul.u32 %s20, 2
        %s143 = sadd.s32 %s142, %s21
        %s144 = smul.u32 16, %s143
        %p145 = scmp.lt.s32.totalorder %s144, 63
        %s146 = scalar_select %p145, %s144, 63
        %s147 = smul.addr %s146, 4
        %s148 = scalar_lea.vmem %s0, %s147
        %p149 = pneg %p53
        %p150 = pneg %p50
        %p151 = pneg %p74
        %p152 = pneg %p71
        %p153 = pneg %p100
        %p154 = pneg %p97
        %s155 = sand.u32 %s87, 1
        %s156 = scalar_lea.sflag [#allocation3], %s155
        %s157 = sand.u32 %s87, 1
        %s158 = smul.addr %s157, 8
        %s159 = scalar_lea.vmem [#allocation2], %s158
        %s160 = smul.u32 %s20, 2
        %s161 = sadd.s32 %s160, %s21
        %s162 = smul.u32 16, %s161
        %p163 = scmp.lt.s32.totalorder %s162, 63
        %s164 = scalar_select %p163, %s162, 63
        %s165 = smul.addr %s164, 4
        %s166 = scalar_lea.vmem %s0, %s165
        %s167 = smul.u32 %s20, 2
        %s168 = sadd.s32 %s167, %s21
        %s169 = smul.u32 16, %s168
        %v171 = vld [vmem:[%s166] sm:$0xf]
        %v172 = vld [vmem:[%s166 + $0x4] sm:$0xf]
        %v173 = vld [vmem:[%s166 + $0x8] sm:$0xf]
        %v174 = vld [vmem:[%s166 + $0xc] sm:$0xf]
        %v175 = vld [vmem:[%s166 + $0x10] sm:$0xf]
        %v176 = vld [vmem:[%s166 + $0x14] sm:$0xf]
        %v177 = vld [vmem:[%s166 + $0x18] sm:$0xf]
        %v178 = vld [vmem:[%s166 + $0x1c] sm:$0xf]
        %v179 = vld [vmem:[%s166 + $0x20] sm:$0xf]
        %v180 = vld [vmem:[%s166 + $0x24] sm:$0xf]
        %v181 = vld [vmem:[%s166 + $0x28] sm:$0xf]
        %v182 = vld [vmem:[%s166 + $0x2c] sm:$0xf]
        %v183 = vld [vmem:[%s166 + $0x30] sm:$0xf]
        %v184 = vld [vmem:[%s166 + $0x34] sm:$0xf]
        %v185 = vld [vmem:[%s166 + $0x38] sm:$0xf]
        %v186 = vld [vmem:[%s166 + $0x3c] sm:$0xf]
        %v187 = vld [vmem:[%s1] sm:$0xf]
        %v188 = vld [vmem:[%s1 + $0x4] sm:$0xf]
        %v189 = vld [vmem:[%s1 + $0x8] sm:$0xf]
        %v190 = vld [vmem:[%s1 + $0xc] sm:$0xf]
        %v191 = vld [vmem:[%s1 + $0x10] sm:$0x3]
        %v208 = vunpack.c.l.b16 %v171
        %v209 = vunpack.c.l.b16 %v172
        %v210 = vunpack.c.l.b16 %v173
        %v211 = vunpack.c.l.b16 %v174
        %v212 = vunpack.c.l.b16 %v175
        %v213 = vunpack.c.l.b16 %v176
        %v214 = vunpack.c.l.b16 %v177
        %v215 = vunpack.c.l.b16 %v178
        %v216 = vunpack.c.l.b16 %v179
        %v217 = vunpack.c.l.b16 %v180
        %v218 = vunpack.c.l.b16 %v181
        %v219 = vunpack.c.l.b16 %v182
        %v220 = vunpack.c.l.b16 %v183
        %v221 = vunpack.c.l.b16 %v184
        %v222 = vunpack.c.l.b16 %v185
        %v223 = vunpack.c.l.b16 %v186
        %v224 = vpack.c.b16 %v209, %v208
        %v225 = vpack.c.b16 %v211, %v210
        %v226 = vpack.c.b16 %v213, %v212
        %v227 = vpack.c.b16 %v215, %v214
        %v228 = vpack.c.b16 %v217, %v216
        %v229 = vpack.c.b16 %v219, %v218
        %v230 = vpack.c.b16 %v221, %v220
        %v231 = vpack.c.b16 %v223, %v222
        %v237 = vunpack.c.l.b16 %v187
        %v238 = vunpack.c.l.b16 %v188
        %v239 = vunpack.c.l.b16 %v189
        %v240 = vunpack.c.l.b16 %v190
        %v241 = vunpack.c.l.b16 %v191
        %v242 = vpack.c.b16 %v238, %v237
        %v243 = vpack.c.b16 %v240, %v239
        %v244 = vpack.c.b16 %v241, %v241
        %vm247 = vcmask 293888
        %v249 = vsel %vm247, %v224, 0
        %v252 = vsel %vm247, %v225, 0
        %v255 = vsel %vm247, %v226, 0
        %v258 = vsel %vm247, %v227, 0
        %v261 = vsel %vm247, %v228, 0
        %v264 = vsel %vm247, %v229, 0
        %v267 = vsel %vm247, %v230, 0
        %v270 = vsel %vm247, %v231, 0
        %vm272 = vcmask 1041408
        %v274 = vsel %vm272, %v244, 0
        %276 = vmatprep.subr.bf16.mxu0 0
        %277 = vmatpush1.bf16.msra.mxu0 %v242
        %278 = vmatprep.subr.bf16.mxu0 0
        %279 = vmatpush1.bf16.msra.mxu0 %v243
        %280 = vmatprep.subr.bf16.mxu0 0
        %281 = vmatpush1.bf16.msra.mxu0 %v274
        %282 = vmatprep.subr.bf16.mxu0 0
        %283 = vmatpush1.bf16.msra.mxu0 0
        %284 = vmatprep.subr.bf16.mxu0 0
        %285 = vmatpush1.bf16.msra.mxu0 0
        %286 = vmatprep.subr.bf16.mxu0 0
        %287 = vmatpush1.bf16.msra.mxu0 0
        %288 = vmatprep.subr.bf16.mxu0 0
        %289 = vmatpush1.bf16.msra.mxu0 0
        %290 = vmatprep.subr.bf16.mxu0 0
        %291 = vmatpush1.bf16.msra.mxu0 0
        %292 = vmatprep.subr.bf16.mxu0 0
        %293 = vmatpush1.bf16.msra.mxu0 0
        %294 = vmatprep.subr.bf16.mxu0 0
        %295 = vmatpush1.bf16.msra.mxu0 0
        %296 = vmatprep.subr.bf16.mxu0 0
        %297 = vmatpush1.bf16.msra.mxu0 0
        %298 = vmatprep.subr.bf16.mxu0 0
        %299 = vmatpush1.bf16.msra.mxu0 0
        %300 = vmatprep.subr.bf16.mxu0 0
        %301 = vmatpush1.bf16.msra.mxu0 0
        %302 = vmatprep.subr.bf16.mxu0 0
        %303 = vmatpush1.bf16.msra.mxu0 0
        %304 = vmatprep.subr.bf16.mxu0 0
        %305 = vmatpush1.bf16.msra.mxu0 0
        %306 = vmatprep.subr.bf16.mxu0 0
        %307 = vmatpush1.bf16.msra.mxu0 0
        %308 = vmatprep.mubr.bf16.mxu0 0
        %309 = vmatmul.mubr.bf16.gmra.mrb[0].mxu0 %v249
        %v310 = vpop.f32.mrb[0].mxu0
        %v311 = vadd.f32 0.0, %v310
        %v312 = vpop.f32.mrb[0].mxu0
        %v313 = vpop.f32.mrb[0].mxu0
        %v314 = vadd.f32 0.0, %v313
        %v315 = vpop.f32.mrb[0].mxu0
        %316 = vmatprep.mubr.bf16.mxu0 0
        %317 = vmatmul.mubr.bf16.gmra.mrb[0].mxu0 %v252
        %v318 = vpop.f32.mrb[0].mxu0
        %v319 = vadd.f32 0.0, %v318
        %v320 = vpop.f32.mrb[0].mxu0
        %v321 = vpop.f32.mrb[0].mxu0
        %v322 = vadd.f32 0.0, %v321
        %v323 = vpop.f32.mrb[0].mxu0
        %324 = vmatprep.mubr.bf16.mxu0 0
        %325 = vmatmul.mubr.bf16.gmra.mrb[0].mxu0 %v255
        %v326 = vpop.f32.mrb[0].mxu0
        %v327 = vadd.f32 0.0, %v326
        %v328 = vpop.f32.mrb[0].mxu0
        %v329 = vpop.f32.mrb[0].mxu0
        %v330 = vadd.f32 0.0, %v329
        %v331 = vpop.f32.mrb[0].mxu0
        %332 = vmatprep.mubr.bf16.mxu0 0
        %333 = vmatmul.mubr.bf16.gmra.mrb[0].mxu0 %v258
        %v334 = vpop.f32.mrb[0].mxu0
        %v335 = vadd.f32 0.0, %v334
        %v336 = vpop.f32.mrb[0].mxu0
        %v337 = vpop.f32.mrb[0].mxu0
        %v338 = vadd.f32 0.0, %v337
        %v339 = vpop.f32.mrb[0].mxu0
        %340 = vmatprep.mubr.bf16.mxu0 0
        %341 = vmatmul.mubr.bf16.gmra.mrb[0].mxu0 %v261
        %v342 = vpop.f32.mrb[0].mxu0
        %v343 = vadd.f32 0.0, %v342
        %v344 = vpop.f32.mrb[0].mxu0
        %v345 = vpop.f32.mrb[0].mxu0
        %v346 = vadd.f32 0.0, %v345
        %v347 = vpop.f32.mrb[0].mxu0
        %348 = vmatprep.mubr.bf16.mxu0 0
        %349 = vmatmul.mubr.bf16.gmra.mrb[0].mxu0 %v264
        %v350 = vpop.f32.mrb[0].mxu0
        %v351 = vadd.f32 0.0, %v350
        %v352 = vpop.f32.mrb[0].mxu0
        %v353 = vpop.f32.mrb[0].mxu0
        %v354 = vadd.f32 0.0, %v353
        %v355 = vpop.f32.mrb[0].mxu0
        %356 = vmatprep.mubr.bf16.mxu0 0
        %357 = vmatmul.mubr.bf16.gmra.mrb[0].mxu0 %v267
        %v358 = vpop.f32.mrb[0].mxu0
        %v359 = vadd.f32 0.0, %v358
        %v360 = vpop.f32.mrb[0].mxu0
        %v361 = vpop.f32.mrb[0].mxu0
        %v362 = vadd.f32 0.0, %v361
        %v363 = vpop.f32.mrb[0].mxu0
        %364 = vmatprep.mubr.bf16.mxu0 0
        %365 = vmatmul.mubr.bf16.gmra.mrb[0].mxu0 %v270
        %v366 = vpop.f32.mrb[0].mxu0
        %v367 = vadd.f32 0.0, %v366
        %v368 = vpop.f32.mrb[0].mxu0
        %v369 = vpop.f32.mrb[0].mxu0
        %v370 = vadd.f32 0.0, %v369
        %v371 = vpop.f32.mrb[0].mxu0
        %372 = vdwg.mxu0
        %p373 = scmp.eq.s32.totalorder %s21, 0
        // Predicated region
        $region29: #{tpu_custom_call.1} parent=27 // pred_check
          %p374 = pneg %p373
        $region30: #{tpu_custom_call.1} parent=27 // pred_check_branch
          %376 = sbr.rel (%p374) target = $region32
        $region31: #{tpu_custom_call.1} parent=27 // pred_region
          %377 = vst [vmem:[%s159] sm:$0xff] 0.0
        $region32: #{tpu_custom_call.1} parent=27 // pred_fallthru
          _
        %v378 = vadd.f32 %v311, %v314
        %v379 = vadd.f32 %v378, %v319
        %v380 = vadd.f32 %v379, %v322
        %v381 = vadd.f32 %v380, %v327
        %v382 = vadd.f32 %v381, %v330
        %v383 = vadd.f32 %v382, %v335
        %v384 = vadd.f32 %v383, %v338
        %v385 = vadd.f32 %v384, %v343
        %v386 = vadd.f32 %v385, %v346
        %v387 = vadd.f32 %v386, %v351
        %v388 = vadd.f32 %v387, %v354
        %v389 = vadd.f32 %v388, %v359
        %v390 = vadd.f32 %v389, %v362
        %v391 = vadd.f32 %v390, %v367
        %v392 = vadd.f32 %v391, %v370
        %v393 = vrot.slane %v392, 4
        %v394 = vadd.f32 %v392, %v393
        %v395 = vrot.slane %v394, 2
        %v396 = vadd.f32 %v394, %v395
        %v397 = vrot.slane %v396, 1
        %v398 = vadd.f32 %v396, %v397
        %v399 = vmul.f32 %v311, %v311
        %v400 = vmul.f32 %v314, %v314
        %v401 = vmul.f32 %v319, %v319
        %v402 = vmul.f32 %v322, %v322
        %v403 = vmul.f32 %v327, %v327
        %v404 = vmul.f32 %v330, %v330
        %v405 = vmul.f32 %v335, %v335
        %v406 = vmul.f32 %v338, %v338
        %v407 = vmul.f32 %v343, %v343
        %v408 = vmul.f32 %v346, %v346
        %v409 = vmul.f32 %v351, %v351
        %v410 = vmul.f32 %v354, %v354
        %v411 = vmul.f32 %v359, %v359
        %v412 = vmul.f32 %v362, %v362
        %v413 = vmul.f32 %v367, %v367
        %v414 = vmul.f32 %v370, %v370
        %v415 = vadd.f32 %v399, %v400
        %v416 = vadd.f32 %v415, %v401
        %v417 = vadd.f32 %v416, %v402
        %v418 = vadd.f32 %v417, %v403
        %v419 = vadd.f32 %v418, %v404
        %v420 = vadd.f32 %v419, %v405
        %v421 = vadd.f32 %v420, %v406
        %v422 = vadd.f32 %v421, %v407
        %v423 = vadd.f32 %v422, %v408
        %v424 = vadd.f32 %v423, %v409
        %v425 = vadd.f32 %v424, %v410
        %v426 = vadd.f32 %v425, %v411
        %v427 = vadd.f32 %v426, %v412
        %v428 = vadd.f32 %v427, %v413
        %v429 = vadd.f32 %v428, %v414
        %v430 = vrot.slane %v429, 4
        %v431 = vadd.f32 %v429, %v430
        %v432 = vrot.slane %v431, 2
        %v433 = vadd.f32 %v431, %v432
        %v434 = vrot.slane %v433, 1
        %v435 = vadd.f32 %v433, %v434
        %v436 = vlaneseq
        %v437 = vshrl.u32 %v436, 7
        %vm438 = vcmp.eq.s32.totalorder %v437, 0
        %v439 = vsel %vm438, 1, 0
        %vm440 = vcmp.eq.s32.totalorder %v439, 1
        %v441 = vsel %vm440, %v398, 0.0
        %vm442 = vcmp.eq.s32.totalorder %v437, 1
        %v443 = vsel %vm442, 1, 0
        %vm444 = vcmp.eq.s32.totalorder %v443, 1
        %v445 = vsel %vm444, %v435, 0.0
        %v446 = vadd.f32 %v441, %v445
        %v447 = vld [vmem:[%s159] sm:$0xff]
        %v448 = vadd.f32 %v447, %v446
        %449 = vst [vmem:[%s159] sm:$0xff] %v448
        %s450 = sand.u32 %s87, 1
        %s451 = scalar_lea.sflag [#allocation3], %s450
        %s452 = sand.u32 %s87, 1
        %s453 = smul.addr %s452, 8
        %s454 = scalar_lea.vmem [#allocation2], %s453
        // Predicated region
        $region33: #{tpu_custom_call.1} parent=27 // pred_check
          %p455 = pneg %p97
        $region34: #{tpu_custom_call.1} parent=27 // pred_check_branch
          %457 = sbr.rel (%p455) target = $region36
        $region35: #{tpu_custom_call.1} parent=27 // pred_region
          %s459 = ssub.s32 128, 128
          %460 = vsyncadd %s451, %s459
          %s461 = smul.addr %s20, 128
          %s462 = scalar_lea.hbm %s2, %s461
          %s464 = sshll.u32 %s454, 4
          %s465 = int_to_ptr.vmem [resolvable:$true] %s464
          %467 = dma.vmem_to_hbm [thread:$0]  %s465, 128, %s462, %s451
        $region36: #{tpu_custom_call.1} parent=27 // pred_fallthru
          _
      $region28: #{tpu_custom_call.1} parent=5 // pred_fallthru
        _
      %p468 = scmp.le.s32.totalorder 2, %s11
      // Predicated region
      $region37: #{tpu_custom_call.1} parent=5 // pred_check
        %p469 = pneg %p468
      $region38: #{tpu_custom_call.1} parent=5 // pred_check_branch
        %471 = sbr.rel (%p469) target = $region40
      $region39: #{tpu_custom_call.1} parent=5 // pred_region
        %s472 = ssub.s32 %s11, 2
        // Predicated region
        $region41: #{tpu_custom_call.1} parent=39 // pred_check
          %p473 = pneg %p103
        $region42: #{tpu_custom_call.1} parent=39 // pred_check_branch
          %475 = sbr.rel (%p473) target = $region44
        $region43: #{tpu_custom_call.1} parent=39 // pred_region
          %s476 = sand.u32 %s88, 1
          %s477 = scalar_lea.sflag [#allocation3], %s476
          %s478 = sand.u32 %s88, 1
          %s479 = smul.addr %s478, 8
          %s480 = scalar_lea.vmem [#allocation2], %s479
          %481 = dma.done %s477, 128
        $region44: #{tpu_custom_call.1} parent=39 // pred_fallthru
          _
      $region40: #{tpu_custom_call.1} parent=5 // pred_fallthru
        _
    $region6: #{tpu_custom_call.1} parent=1 // loop_footer
      %s15 = sadd.s32 1, %s11
    $region7: #{tpu_custom_call.1} parent=1 // loop_footer_branch
      %10 = sbr.rel target = $region3
    $region8: #{tpu_custom_call.1} parent=1 // loop_exit
      _
    %482 = vsyncpa [#allocation3], 1
    %s483 = scalar_lea.sflag [#allocation3], 1
    %484 = vsyncpa %s483, 1

</llo_original>
